<compile_context>
chip_gen: v5e
topology: v5e:2x2
jax: 0.10.0
libtpu: 0.0.40
codegen_flags: <defaults>
</compile_context>

<pallas_src>
import functools

import jax
import jax.numpy as jnp
from jax import lax
from jax.experimental import pallas as pl
from jax.experimental.pallas import tpu as pltpu

BN_EPS = 1e-5


# --------------------------------------------------------------------------
# Pass 1: BN batch statistics -> per-channel scale / shift.
# Accumulates first/second moments of x (not h): sum_x (Cin,1) and the Gram
# matrix G (Cin,Cin) live in one VMEM scratch of shape (Cin, Cin+1); the
# finalize step recovers sum(h) and sum(h*h) exactly via w1.
# --------------------------------------------------------------------------
def _stats_kernel(x_ref, w1_ref, gamma_ref, beta_ref, scale_ref, shift_ref,
                  mom_ref, *, inv_m, bn):
    # x_ref:     (Bn, Cin, tl)   tokens on lanes
    # w1_ref:    (Chid, Cin)
    # gamma/beta:(Chid, 1)
    # outputs:   scale_ref/shift_ref (Chid, 1)
    # scratch:   mom_ref (Cin, Cin+1)  [:, :Cin] = Gram, [:, Cin] = sum_x
    cin = x_ref.shape[1]
    nb = pl.program_id(0)
    lt = pl.program_id(1)
    is_first = jnp.logical_and(nb == 0, lt == 0)
    is_last = jnp.logical_and(nb == pl.num_programs(0) - 1,
                              lt == pl.num_programs(1) - 1)

    @pl.when(is_first)
    def _init():
        mom_ref[...] = jnp.zeros_like(mom_ref)

    # Accumulate moments of x over the tokens in this block.  No (Chid, tl)
    # temporary is produced -> pass 1 is essentially DMA-bound.
    g = jnp.zeros((cin, cin), jnp.float32)
    sx = jnp.zeros((cin, 1), jnp.float32)
    for b in range(bn):                               # bn is a static Python int
        xb = x_ref[b]                                 # (Cin, tl)
        # Gram update: contraction over the token (lane) axis, "nt" layout.
        g = g + lax.dot_general(xb, xb, (((1,), (1,)), ((), ())),
                                preferred_element_type=jnp.float32)
        sx = sx + jnp.sum(xb.astype(jnp.float32), axis=1, keepdims=True)
    mom_ref[:, :cin] += g
    mom_ref[:, cin:cin + 1] += sx

    @pl.when(is_last)
    def _finalize():
        w1 = w1_ref[...].astype(jnp.float32)          # (Chid, Cin)
        # Single small matmul: [:, :Cin] -> w1 @ G, [:, Cin] -> w1 @ sum_x.
        m = jnp.dot(w1, mom_ref[...],
                    preferred_element_type=jnp.float32)    # (Chid, Cin+1)
        sum_h = m[:, cin:cin + 1]                          # (Chid, 1)
        sumsq_h = jnp.sum(m[:, :cin] * w1, axis=1, keepdims=True)
        mean = sum_h * inv_m
        var = jnp.maximum(sumsq_h * inv_m - mean * mean, 0.0)  # guard cancellation
        scale = gamma_ref[...] * lax.rsqrt(var + BN_EPS)
        scale_ref[...] = scale
        shift_ref[...] = beta_ref[...] - mean * scale


# --------------------------------------------------------------------------
# Pass 2: conv1 -> BN (scale/shift) -> ReLU -> conv2, fully parallel grid.
# Lane axis is chunked internally so compute temporaries stay small while
# the DMA block stays large.
# --------------------------------------------------------------------------
def _apply_kernel(x_ref, w1_ref, w2_ref, scale_ref, shift_ref, o_ref,
                  *, bn, tl, ct):
    # x_ref: (Bn, Cin, tl); o_ref: (Bn, Cout, tl)
    w1 = w1_ref[...]
    w2 = w2_ref[...]
    scale = scale_ref[...]                            # (Chid, 1) f32
    shift = shift_ref[...]
    n_chunks = tl // ct

    def compute_chunk(b, c0):
        xb = x_ref[b, :, pl.ds(c0, ct)]               # (Cin, ct)
        h = jnp.dot(w1, xb, preferred_element_type=jnp.float32)   # (Chid, ct)
        hn = jnp.maximum(h * scale + shift, 0.0)
        y = jnp.dot(w2, hn.astype(w2.dtype),
                    preferred_element_type=jnp.float32)            # (Cout, ct)
        o_ref[b, :, pl.ds(c0, ct)] = y.astype(o_ref.dtype)

    for b in range(bn):                               # static batch fold
        if n_chunks == 1:
            compute_chunk(b, 0)
        else:
            def body(c, carry, b=b):
                compute_chunk(b, pl.multiple_of(c * ct, ct))
                return carry
            lax.fori_loop(0, n_chunks, body, 0)


def mlp1d_pallas(x_ncl, w1, w2, gamma, beta, *, io_dtype=jnp.float32):
    """x_ncl: (N, Cin, L); w1: (Chid, Cin); w2: (Cout, Chid); gamma/beta: (Chid,).

    io_dtype=jnp.bfloat16 halves HBM traffic for production shapes (BN math and
    matmul accumulation stay f32) but loosens the achievable tolerance.
    """
    N, Cin, L = x_ncl.shape
    Chid = w1.shape[0]
    Cout = w2.shape[0]

    # ---- lane density: pad L up to a multiple of 128 -----------------------
    Lp = ((L + 127) // 128) * 128
    if Lp != L:
        # Zero tokens contribute 0 to sum(x) and x x^T -> BN stats stay exact
        # as long as inv_m keeps the ORIGINAL token count.
        x_ncl = jnp.pad(x_ncl, ((0, 0), (0, 0), (0, Lp - L)))

    itemsize = jnp.dtype(io_dtype).itemsize

    # ---- tile selection (re-derived per shape; budget safe for v7x) --------
    budget = 24 << 20                        # double-buffered x + out blocks
    tl = 128
    for cand in (8192, 4096, 2048, 1024, 512, 256, 128):
        if Lp % cand == 0:
            tl = cand
            break
    while tl > 128 and 2 * (Cin + Cout) * tl * itemsize > budget:
        tl //= 2                             # stays a multiple of 128 dividing Lp
    bn = 1
    for cand in (8, 4, 2, 1):
        if N % cand == 0 and 2 * cand * (Cin + Cout) * tl * itemsize <= budget:
            bn = cand
            break
    # Compute sub-tile: keep the (Chid, ct) f32 temporaries around <=128 KiB.
    ct = tl
    while ct > 128 and Chid * ct * 4 > (128 << 10):
        ct //= 2

    num_nb = N // bn
    num_lt = Lp // tl
    blk_bytes = 2 * bn * (Cin + Cout) * tl * itemsize
    # >= 32 MiB so v5e's 16 MiB default does not force smaller tiles; <= 48 MiB
    # so we never plan past v7x's 64 MiB physical VMEM.
    vmem_limit = int(min(48 << 20, max(32 << 20, 4 * blk_bytes)))

    x_io = x_ncl.astype(io_dtype)
    w1_io = w1.astype(io_dtype)
    w2_io = w2.astype(io_dtype)
    gamma2 = gamma.reshape(Chid, 1).astype(jnp.float32)
    beta2 = beta.reshape(Chid, 1).astype(jnp.float32)

    inv_m = 1.0 / float(N * L)               # original token count (no padding)

    # ---- pass 1: BN batch statistics -> per-channel scale / shift ----------
    scale, shift = pl.pallas_call(
        functools.partial(_stats_kernel, inv_m=inv_m, bn=bn),
        out_shape=(jax.ShapeDtypeStruct((Chid, 1), jnp.float32),
                   jax.ShapeDtypeStruct((Chid, 1), jnp.float32)),
        grid_spec=pltpu.PrefetchScalarGridSpec(
            num_scalar_prefetch=0,
            grid=(num_nb, num_lt),
            in_specs=[
                pl.BlockSpec((bn, Cin, tl), lambda nb, lt: (nb, 0, lt)),
                pl.BlockSpec((Chid, Cin), lambda nb, lt: (0, 0)),
                pl.BlockSpec((Chid, 1), lambda nb, lt: (0, 0)),
                pl.BlockSpec((Chid, 1), lambda nb, lt: (0, 0)),
            ],
            out_specs=[
                pl.BlockSpec((Chid, 1), lambda nb, lt: (0, 0)),
                pl.BlockSpec((Chid, 1), lambda nb, lt: (0, 0)),
            ],
            scratch_shapes=[
                pltpu.VMEM((Cin, Cin + 1), jnp.float32),   # [Gram | sum_x]
            ],
        ),
        compiler_params=pltpu.CompilerParams(
            # Sequential cross-tile reduction -> both axes must stay arbitrary.
            dimension_semantics=("arbitrary", "arbitrary"),
            vmem_limit_bytes=vmem_limit,
        ),
    )(x_io, w1_io, gamma2, beta2)

    # ---- pass 2: fused conv1 -> BN -> ReLU -> conv2 (fully parallel) -------
    out = pl.pallas_call(
        functools.partial(_apply_kernel, bn=bn, tl=tl, ct=ct),
        out_shape=jax.ShapeDtypeStruct((N, Cout, Lp), io_dtype),
        grid_spec=pltpu.PrefetchScalarGridSpec(
            num_scalar_prefetch=0,
            grid=(num_nb, num_lt),
            in_specs=[
                pl.BlockSpec((bn, Cin, tl), lambda nb, lt: (nb, 0, lt)),
                pl.BlockSpec((Chid, Cin), lambda nb, lt: (0, 0)),
                pl.BlockSpec((Cout, Chid), lambda nb, lt: (0, 0)),
                pl.BlockSpec((Chid, 1), lambda nb, lt: (0, 0)),
                pl.BlockSpec((Chid, 1), lambda nb, lt: (0, 0)),
            ],
            out_specs=pl.BlockSpec((bn, Cout, tl), lambda nb, lt: (nb, 0, lt)),
        ),
        compiler_params=pltpu.CompilerParams(
            # Independent output tiles -> let v7x shard across both TensorCores.
            dimension_semantics=("parallel", "parallel"),
            vmem_limit_bytes=vmem_limit,
        ),
    )(x_io, w1_io, w2_io, scale, shift)

    if Lp != L:
        out = out[:, :, :L]                  # drop padded lane columns
    return out                               # (N, Cout, L), native NCL layout


def mlp1d_reference(x_ncl, w1, w2, gamma, beta):
    """Pure-JAX reference mirroring the PyTorch forward (training-mode BN)."""
    h = jnp.einsum("ncl,hc->nhl", x_ncl, w1)
    mean = h.mean(axis=(0, 2), keepdims=True)
    var = ((h - mean) ** 2).mean(axis=(0, 2), keepdims=True)
    hn = (h - mean) / jnp.sqrt(var + BN_EPS)
    hn = hn * gamma[None, :, None] + beta[None, :, None]
    hn = jnp.maximum(hn, 0.0)
    return jnp.einsum("nhl,oh->nol", hn, w2)


if __name__ == "__main__":
    # Small shapes consistent with the module: MLP1D(in=4, hid=32, out=16, num_mlp=2)
    N, Cin, L = 2, 4, 16
    Chid, Cout = 32, 16

    key = jax.random.PRNGKey(0)
    kx, kw1, kw2, kg, kb = jax.random.split(key, 5)

    x = jax.random.normal(kx, (N, Cin, L), dtype=jnp.float32)
    # Conv1d weights: (out_ch, in_ch, 1) in torch -> kernel dim squeezed here.
    w1 = 0.1 * jax.random.normal(kw1, (Chid, Cin), dtype=jnp.float32)
    w2 = 0.1 * jax.random.normal(kw2, (Cout, Chid), dtype=jnp.float32)
    # BatchNorm1d affine params (near the PyTorch defaults 1 / 0).
    gamma = 1.0 + 0.05 * jax.random.normal(kg, (Chid,), dtype=jnp.float32)
    beta = 0.05 * jax.random.normal(kb, (Chid,), dtype=jnp.float32)

    out = jax.block_until_ready(mlp1d_pallas(x, w1, w2, gamma, beta))
    ref = mlp1d_reference(x, w1, w2, gamma, beta)

    assert out.shape == (N, Cout, L), out.shape
    max_err = float(jnp.max(jnp.abs(out - ref)))
    assert jnp.allclose(out, ref, atol=1e-4, rtol=1e-4), max_err

    # TODO(synk): BatchNorm1d running_mean/running_var momentum updates (a training
    # side-effect, not part of the forward output) are not emitted by this kernel.
    print("KERNEL_OK")
</pallas_src>

<mosaic_0001>
module attributes {stable_mosaic.version = 11 : i64} {
  func.func @_stats_kernel(%arg0: i32, %arg1: i32, %arg2: memref<2x4x128xf32, #tpu.memory_space<vmem>>, %arg3: memref<32x4xf32, #tpu.memory_space<vmem>>, %arg4: memref<32x1xf32, #tpu.memory_space<vmem>>, %arg5: memref<32x1xf32, #tpu.memory_space<vmem>>, %arg6: memref<32x1xf32, #tpu.memory_space<vmem>>, %arg7: memref<32x1xf32, #tpu.memory_space<vmem>>, %arg8: memref<4x5xf32, #tpu.memory_space<vmem>>) attributes {dimension_semantics = [#tpu.dimension_semantics<arbitrary>, #tpu.dimension_semantics<arbitrary>], iteration_bounds = array<i64: 1, 1>, scalar_prefetch = 0 : i64, scratch_operands = 1 : i64, tpu.core_type = #tpu.core_type<tc>, window_params = [{transform_indices = @transform_0, window_bounds = array<i64: 2, 4, 128>}, {pipeline_mode = #tpu.pipeline_mode<synchronous>, transform_indices = @transform_1, window_bounds = array<i64: 32, 4>}, {pipeline_mode = #tpu.pipeline_mode<synchronous>, transform_indices = @transform_2, window_bounds = array<i64: 32, 1>}, {pipeline_mode = #tpu.pipeline_mode<synchronous>, transform_indices = @transform_3, window_bounds = array<i64: 32, 1>}, {pipeline_mode = #tpu.pipeline_mode<synchronous>, transform_indices = @transform_4, window_bounds = array<i64: 32, 1>}, {pipeline_mode = #tpu.pipeline_mode<synchronous>, transform_indices = @transform_5, window_bounds = array<i64: 32, 1>}]} {
    %c0_i32 = arith.constant 0 : i32
    %0 = arith.cmpi eq, %arg0, %c0_i32 : i32
    %c0_i32_0 = arith.constant 0 : i32
    %1 = arith.cmpi eq, %arg1, %c0_i32_0 : i32
    %2 = arith.andi %0, %1 : i1
    %c0_i32_1 = arith.constant 0 : i32
    %3 = arith.cmpi eq, %arg0, %c0_i32_1 : i32
    %c0_i32_2 = arith.constant 0 : i32
    %4 = arith.cmpi eq, %arg1, %c0_i32_2 : i32
    %5 = arith.andi %3, %4 : i1
    %6 = arith.extui %2 : i1 to i32
    %c0_i32_3 = arith.constant 0 : i32
    %7 = arith.cmpi ne, %6, %c0_i32_3 : i32
    scf.if %7 {
      %cst_21 = arith.constant 0.000000e+00 : f32
      %32 = vector.broadcast %cst_21 : f32 to vector<4x5xf32>
      %c0_22 = arith.constant 0 : index
      %c0_23 = arith.constant 0 : index
      %33 = vector.load %arg8[%c0_22, %c0_23] : memref<4x5xf32, #tpu.memory_space<vmem>>, vector<4x5xf32>
      tpu.vector_store %arg8[%c0_22, %c0_23], %32 {strides = array<i32>} : memref<4x5xf32, #tpu.memory_space<vmem>>, vector<4x5xf32>,
    } else {
    }
    %cst = arith.constant 0.000000e+00 : f32
    %8 = vector.broadcast %cst : f32 to vector<4x4xf32>
    %cst_4 = arith.constant 0.000000e+00 : f32
    %9 = vector.broadcast %cst_4 : f32 to vector<4x1xf32>
    %c0 = arith.constant 0 : index
    %c0_5 = arith.constant 0 : index
    %c0_6 = arith.constant 0 : index
    %10 = vector.load %arg2[%c0, %c0_5, %c0_6] : memref<2x4x128xf32, #tpu.memory_space<vmem>>, vector<1x4x128xf32>
    %11 = vector.shape_cast %10 : vector<1x4x128xf32> to vector<4x128xf32>
    %cst_7 = arith.constant dense<0.000000e+00> : vector<4x4xf32>
    %12 = tpu.matmul %11, %11, %cst_7 {dimension_numbers = #tpu.dot_dimension_numbers<[1], [1], [0], [0], [0, 0, 1, 0], [], []>} : vector<4x128xf32>, vector<4x128xf32>, vector<4x4xf32> -> vector<4x4xf32>
    %13 = arith.addf %8, %12 : vector<4x4xf32>
    %cst_8 = arith.constant dense<0.000000e+00> : vector<4xf32>
    %14 = vector.multi_reduction <add>, %11, %cst_8 [1] : vector<4x128xf32> to vector<4xf32>
    %15 = vector.shape_cast %14 : vector<4xf32> to vector<4x1xf32>
    %16 = arith.addf %9, %15 : vector<4x1xf32>
    %c1 = arith.constant 1 : index
    %c0_9 = arith.constant 0 : index
    %c0_10 = arith.constant 0 : index
    %17 = vector.load %arg2[%c1, %c0_9, %c0_10] : memref<2x4x128xf32, #tpu.memory_space<vmem>>, vector<1x4x128xf32>
    %18 = vector.shape_cast %17 : vector<1x4x128xf32> to vector<4x128xf32>
    %cst_11 = arith.constant dense<0.000000e+00> : vector<4x4xf32>
    %19 = tpu.matmul %18, %18, %cst_11 {dimension_numbers = #tpu.dot_dimension_numbers<[1], [1], [0], [0], [0, 0, 1, 0], [], []>} : vector<4x128xf32>, vector<4x128xf32>, vector<4x4xf32> -> vector<4x4xf32>
    %20 = arith.addf %13, %19 : vector<4x4xf32>
    %cst_12 = arith.constant dense<0.000000e+00> : vector<4xf32>
    %21 = vector.multi_reduction <add>, %18, %cst_12 [1] : vector<4x128xf32> to vector<4xf32>
    %22 = vector.shape_cast %21 : vector<4xf32> to vector<4x1xf32>
    %23 = arith.addf %16, %22 : vector<4x1xf32>
    %c0_13 = arith.constant 0 : index
    %c0_14 = arith.constant 0 : index
    %24 = vector.load %arg8[%c0_13, %c0_14] : memref<4x5xf32, #tpu.memory_space<vmem>>, vector<4x4xf32>
    %25 = arith.addf %24, %20 : vector<4x4xf32>
    %c0_15 = arith.constant 0 : index
    %c0_16 = arith.constant 0 : index
    %26 = vector.load %arg8[%c0_15, %c0_16] : memref<4x5xf32, #tpu.memory_space<vmem>>, vector<4x4xf32>
    tpu.vector_store %arg8[%c0_15, %c0_16], %25 {strides = array<i32>} : memref<4x5xf32, #tpu.memory_space<vmem>>, vector<4x4xf32>,
    %c0_17 = arith.constant 0 : index
    %c4 = arith.constant 4 : index
    %27 = vector.load %arg8[%c0_17, %c4] : memref<4x5xf32, #tpu.memory_space<vmem>>, vector<4x1xf32>
    %28 = arith.addf %27, %23 : vector<4x1xf32>
    %c0_18 = arith.constant 0 : index
    %c4_19 = arith.constant 4 : index
    %29 = vector.load %arg8[%c0_18, %c4_19] : memref<4x5xf32, #tpu.memory_space<vmem>>, vector<4x1xf32>
    tpu.vector_store %arg8[%c0_18, %c4_19], %28 {strides = array<i32>} : memref<4x5xf32, #tpu.memory_space<vmem>>, vector<4x1xf32>,
    %30 = arith.extui %5 : i1 to i32
    %c0_i32_20 = arith.constant 0 : i32
    %31 = arith.cmpi ne, %30, %c0_i32_20 : i32
    scf.if %31 {
      %c0_21 = arith.constant 0 : index
      %c0_22 = arith.constant 0 : index
      %32 = vector.load %arg3[%c0_21, %c0_22] : memref<32x4xf32, #tpu.memory_space<vmem>>, vector<32x4xf32>
      %c0_23 = arith.constant 0 : index
      %c0_24 = arith.constant 0 : index
      %33 = vector.load %arg8[%c0_23, %c0_24] : memref<4x5xf32, #tpu.memory_space<vmem>>, vector<4x5xf32>
      %cst_25 = arith.constant dense<0.000000e+00> : vector<32x5xf32>
      %34 = tpu.matmul %32, %33, %cst_25 {dimension_numbers = #tpu.dot_dimension_numbers<[1], [0], [0], [1], [0, 0, 1, 1], [], []>} : vector<32x4xf32>, vector<4x5xf32>, vector<32x5xf32> -> vector<32x5xf32>
      %35 = vector.extract_strided_slice %34 {offsets = [0, 4], sizes = [32, 1], strides = [1, 1]} : vector<32x5xf32> to vector<32x1xf32>
      %36 = vector.extract_strided_slice %34 {offsets = [0, 0], sizes = [32, 4], strides = [1, 1]} : vector<32x5xf32> to vector<32x4xf32>
      %37 = arith.mulf %36, %32 : vector<32x4xf32>
      %cst_26 = arith.constant dense<0.000000e+00> : vector<32xf32>
      %38 = vector.multi_reduction <add>, %37, %cst_26 [1] : vector<32x4xf32> to vector<32xf32>
      %39 = vector.shape_cast %38 : vector<32xf32> to vector<32x1xf32>
      %cst_27 = arith.constant 3.125000e-02 : f32
      %40 = vector.broadcast %cst_27 : f32 to vector<32x1xf32>
      %41 = arith.mulf %35, %40 : vector<32x1xf32>
      %cst_28 = arith.constant 3.125000e-02 : f32
      %42 = vector.broadcast %cst_28 : f32 to vector<32x1xf32>
      %43 = arith.mulf %39, %42 : vector<32x1xf32>
      %44 = arith.mulf %41, %41 : vector<32x1xf32>
      %45 = arith.subf %43, %44 : vector<32x1xf32>
      %cst_29 = arith.constant 0.000000e+00 : f32
      %46 = vector.broadcast %cst_29 : f32 to vector<32x1xf32>
      %47 = arith.maximumf %45, %46 : vector<32x1xf32>
      %c0_30 = arith.constant 0 : index
      %c0_31 = arith.constant 0 : index
      %48 = vector.load %arg4[%c0_30, %c0_31] : memref<32x1xf32, #tpu.memory_space<vmem>>, vector<32x1xf32>
      %cst_32 = arith.constant 9.99999974E-6 : f32
      %49 = vector.broadcast %cst_32 : f32 to vector<32x1xf32>
      %50 = arith.addf %47, %49 : vector<32x1xf32>
      %51 = math.rsqrt %50 : vector<32x1xf32>
      %52 = arith.mulf %48, %51 : vector<32x1xf32>
      %c0_33 = arith.constant 0 : index
      %c0_34 = arith.constant 0 : index
      %53 = vector.load %arg6[%c0_33, %c0_34] : memref<32x1xf32, #tpu.memory_space<vmem>>, vector<32x1xf32>
      tpu.vector_store %arg6[%c0_33, %c0_34], %52 {strides = array<i32>} : memref<32x1xf32, #tpu.memory_space<vmem>>, vector<32x1xf32>,
      %c0_35 = arith.constant 0 : index
      %c0_36 = arith.constant 0 : index
      %54 = vector.load %arg5[%c0_35, %c0_36] : memref<32x1xf32, #tpu.memory_space<vmem>>, vector<32x1xf32>
      %55 = arith.mulf %41, %52 : vector<32x1xf32>
      %56 = arith.subf %54, %55 : vector<32x1xf32>
      %c0_37 = arith.constant 0 : index
      %c0_38 = arith.constant 0 : index
      %57 = vector.load %arg7[%c0_37, %c0_38] : memref<32x1xf32, #tpu.memory_space<vmem>>, vector<32x1xf32>
      tpu.vector_store %arg7[%c0_37, %c0_38], %56 {strides = array<i32>} : memref<32x1xf32, #tpu.memory_space<vmem>>, vector<32x1xf32>,
    } else {
    }
    return
  }
  func.func @transform_0(%arg0: i32, %arg1: i32) -> (i32, i32, i32) {
    %c0_i32 = arith.constant 0 : i32
    %c0_i32_0 = arith.constant 0 : i32
    return %arg0, %c0_i32, %arg1 : i32, i32, i32
  }
  func.func @transform_1(%arg0: i32, %arg1: i32) -> (i32, i32) {
    %c0_i32 = arith.constant 0 : i32
    %c0_i32_0 = arith.constant 0 : i32
    %c0_i32_1 = arith.constant 0 : i32
    return %c0_i32, %c0_i32_0 : i32, i32
  }
  func.func @transform_2(%arg0: i32, %arg1: i32) -> (i32, i32) {
    %c0_i32 = arith.constant 0 : i32
    %c0_i32_0 = arith.constant 0 : i32
    %c0_i32_1 = arith.constant 0 : i32
    return %c0_i32, %c0_i32_0 : i32, i32
  }
  func.func @transform_3(%arg0: i32, %arg1: i32) -> (i32, i32) {
    %c0_i32 = arith.constant 0 : i32
    %c0_i32_0 = arith.constant 0 : i32
    %c0_i32_1 = arith.constant 0 : i32
    return %c0_i32, %c0_i32_0 : i32, i32
  }
  func.func @transform_4(%arg0: i32, %arg1: i32) -> (i32, i32) {
    %c0_i32 = arith.constant 0 : i32
    %c0_i32_0 = arith.constant 0 : i32
    %c0_i32_1 = arith.constant 0 : i32
    return %c0_i32, %c0_i32_0 : i32, i32
  }
  func.func @transform_5(%arg0: i32, %arg1: i32) -> (i32, i32) {
    %c0_i32 = arith.constant 0 : i32
    %c0_i32_0 = arith.constant 0 : i32
    %c0_i32_1 = arith.constant 0 : i32
    return %c0_i32, %c0_i32_0 : i32, i32
  }
}

</mosaic_0001>

<llo_original>
// kernel: tpu_custom_call.1
$region0: #{tpu_custom_call.1}
  #allocation0 [shape = 'u32[]', space=smem, size = 0x4, offset = 0x4, fixed_abs, tag = 'smem constant byte address 0x4 - core index']
  #allocation1 [shape = 'u32[72,128]{1,0:T(1,128)}', space=vmem, size = 0x9000, scoped, tag = 'internal scratch']
  #allocation2 [shape = 'f32[4,5]{1,0:T(4,128)}', space=vmem, size = 0x800, scoped, tag = 'scratch operand']
  %s0 = inlined_call_operand.vmem [shape: f32[2,4,128], index: 0, kind: input, shape index: {}]
  %s1 = inlined_call_operand.vmem [shape: f32[32,4], index: 1, kind: input, shape index: {}]
  %s2 = inlined_call_operand.vmem [shape: f32[32,1], index: 2, kind: input, shape index: {}]
  %s3 = inlined_call_operand.vmem [shape: f32[32,1], index: 3, kind: input, shape index: {}]
  %s4 = inlined_call_operand.vmem [shape: f32[32,1], index: 4, kind: output, shape index: {0}]
  %s5 = inlined_call_operand.vmem [shape: f32[32,1], index: 5, kind: output, shape index: {1}]
  %6 = xla_tuple %s4, %s5
  %s7 = sld [smem:[#allocation0]]
  $region42: #{tpu_custom_call.1} parent=0
    _
  %s9 = ssub.s32 1, %s7
  %s10 = scalar_select 0, %s9, %s7
  // Predicated region
  $region2: #{tpu_custom_call.1} parent=0 // pred_check
    _
  $region3: #{tpu_custom_call.1} parent=0 // pred_check_branch
    %12 = sbr.rel (0) target = $region5
  $region4: #{tpu_custom_call.1} parent=0 // pred_region
    _
  $region5: #{tpu_custom_call.1} parent=0 // pred_fallthru
    _
  // Predicated region
  $region6: #{tpu_custom_call.1} parent=0 // pred_check
    _
  $region7: #{tpu_custom_call.1} parent=0 // pred_check_branch
    %14 = sbr.rel (0) target = $region9
  $region8: #{tpu_custom_call.1} parent=0 // pred_region
    _
  $region9: #{tpu_custom_call.1} parent=0 // pred_fallthru
    _
  // Predicated region
  $region10: #{tpu_custom_call.1} parent=0 // pred_check
    _
  $region11: #{tpu_custom_call.1} parent=0 // pred_check_branch
    %16 = sbr.rel (0) target = $region13
  $region12: #{tpu_custom_call.1} parent=0 // pred_region
    _
  $region13: #{tpu_custom_call.1} parent=0 // pred_fallthru
    _
  // Predicated region
  $region14: #{tpu_custom_call.1} parent=0 // pred_check
    _
  $region15: #{tpu_custom_call.1} parent=0 // pred_check_branch
    %18 = sbr.rel (0) target = $region17
  $region16: #{tpu_custom_call.1} parent=0 // pred_region
    _
  $region17: #{tpu_custom_call.1} parent=0 // pred_fallthru
    _
  %p19 = scmp.eq.s32.totalorder 0, 0
  %p20 = scmp.eq.s32.totalorder 0, 0
  %p21 = pnand %p19, %p20
  %p22 = pneg %p21
  // Predicated region
  $region18: #{tpu_custom_call.1} parent=0 // pred_check
    _
  $region19: #{tpu_custom_call.1} parent=0 // pred_check_branch
    %24 = sbr.rel (%p21) target = $region21
  $region20: #{tpu_custom_call.1} parent=0 // pred_region
    %vm25 = vcmask 35840
    %26 = vst.msk [vmem:[#allocation2] sm:$0xf] %vm25, 0.0
  $region21: #{tpu_custom_call.1} parent=0 // pred_fallthru
    _
  %v27 = vld [vmem:[%s0] sm:$0xf]
  %vm28 = vcmask 1043456
  %v29 = vsel %vm28, %v27, 0.0
  %30 = vadd.xlane.f32.xlu0 %v29
  %v31 = vpop.xlane.xlu0 %30
  %v32 = vadd.f32 %v31, 0.0
  %s33 = scalar_lea.vmem %s0, 4
  %v34 = vld [vmem:[%s33] sm:$0xf]
  %35 = vmatpush.xpose.msra.mxu0 0.0
  %36 = vmatpush.xpose.msra.mxu0 0.0
  %37 = vmatpush.xpose.msra.mxu0 0.0
  %38 = vmatpush.xpose.msra.mxu0 0.0
  %39 = vmatpush.xpose.msra.mxu0 0.0
  %40 = vmatpush.xpose.msra.mxu0 0.0
  %41 = vmatpush.xpose.msra.mxu0 0.0
  %42 = vmatpush.xpose.msra.mxu0 0.0
  %43 = vmatpush.xpose.msra.mxu0 0.0
  %44 = vmatpush.xpose.msra.mxu0 0.0
  %45 = vmatpush.xpose.msra.mxu0 0.0
  %46 = vmatpush.xpose.msra.mxu0 0.0
  %47 = vmatpush.xpose.msra.mxu0 0.0
  %48 = vmatpush.xpose.msra.mxu0 0.0
  %49 = vmatpush.xpose.msra.mxu0 0.0
  %50 = vmatpush.xpose.msra.mxu0 %v34
  %51 = vmatmul.f32.gmra.mxu0 %v34
  %v52 = vpop.f32.mrf.mxu0
  %v53 = vadd.f32 0.0, %v52
  %54 = vdwg.mxu0
  %55 = vmatpush.xpose.msra.mxu0 0.0
  %56 = vmatpush.xpose.msra.mxu0 0.0
  %57 = vmatpush.xpose.msra.mxu0 0.0
  %58 = vmatpush.xpose.msra.mxu0 0.0
  %59 = vmatpush.xpose.msra.mxu0 0.0
  %60 = vmatpush.xpose.msra.mxu0 0.0
  %61 = vmatpush.xpose.msra.mxu0 0.0
  %62 = vmatpush.xpose.msra.mxu0 0.0
  %63 = vmatpush.xpose.msra.mxu0 0.0
  %64 = vmatpush.xpose.msra.mxu0 0.0
  %65 = vmatpush.xpose.msra.mxu0 0.0
  %66 = vmatpush.xpose.msra.mxu0 0.0
  %67 = vmatpush.xpose.msra.mxu0 0.0
  %68 = vmatpush.xpose.msra.mxu0 0.0
  %69 = vmatpush.xpose.msra.mxu0 0.0
  %70 = vmatpush.xpose.msra.mxu0 %v27
  %71 = vmatmul.f32.gmra.mxu0 %v27
  %v72 = vpop.f32.mrf.mxu0
  %v73 = vadd.f32 %v53, %v72
  %74 = vdwg.mxu0
  %v75 = vsel %vm28, %v34, 0.0
  %76 = vadd.xlane.f32.xlu0 %v75
  %v77 = vpop.xlane.xlu0 %76
  %v78 = vadd.f32 %v32, %v77
  %v79 = vld [vmem:[#allocation2] sm:$0xf]
  %v80 = vadd.f32 %v79, %v73
  %vm81 = vcmask 27648
  %82 = vst.msk [vmem:[#allocation2] sm:$0xf] %vm81, %v80
  %v83 = vld [vmem:[#allocation2] sm:$0xf]
  %v84 = vadd.f32 %v83, %v78
  %vm85 = vcmask 35872
  %86 = vst.msk [vmem:[#allocation2] sm:$0xf] %vm85, %v84
  // Predicated region
  $region22: #{tpu_custom_call.1} parent=0 // pred_check
    _
  $region23: #{tpu_custom_call.1} parent=0 // pred_check_branch
    %88 = sbr.rel (%p21) target = $region25
  $region24: #{tpu_custom_call.1} parent=0 // pred_region
    %v89 = vld [vmem:[%s1] sm:$0xff]
    %v90 = vld [vmem:[%s1 + $0x8] sm:$0xff]
    %v91 = vld [vmem:[%s1 + $0x10] sm:$0xff]
    %v92 = vld [vmem:[%s1 + $0x18] sm:$0xff]
    %v93 = vld [vmem:[#allocation2] sm:$0xf]
    %vm94 = vcmask 31744
    %v96 = vsel %vm94, %v89, 0
    %v99 = vsel %vm94, %v90, 0
    %v102 = vsel %vm94, %v91, 0
    %v105 = vsel %vm94, %v92, 0
    %v108 = vsel %vm28, %v93, 0
    %110 = vmatpush.msra.mxu0 0.0
    %111 = vmatpush.msra.mxu0 0.0
    %112 = vmatpush.msra.mxu0 0.0
    %113 = vmatpush.msra.mxu0 0.0
    %114 = vmatpush.msra.mxu0 0.0
    %115 = vmatpush.msra.mxu0 0.0
    %116 = vmatpush.msra.mxu0 0.0
    %117 = vmatpush.msra.mxu0 0.0
    %118 = vmatpush.msra.mxu0 0.0
    %119 = vmatpush.msra.mxu0 0.0
    %120 = vmatpush.msra.mxu0 0.0
    %121 = vmatpush.msra.mxu0 0.0
    %122 = vmatpush.msra.mxu0 0.0
    %123 = vmatpush.msra.mxu0 0.0
    %124 = vmatpush.msra.mxu0 0.0
    %125 = vmatpush.msra.mxu0 %v108
    %126 = vmatmul.f32.gmra.mxu0 %v96
    %v127 = vpop.f32.mrf.mxu0
    %v128 = vadd.f32 0.0, %v127
    %129 = vmatmul.f32.gmra.mxu0 %v99
    %v130 = vpop.f32.mrf.mxu0
    %v131 = vadd.f32 0.0, %v130
    %132 = vmatmul.f32.gmra.mxu0 %v102
    %v133 = vpop.f32.mrf.mxu0
    %v134 = vadd.f32 0.0, %v133
    %135 = vmatmul.f32.gmra.mxu0 %v105
    %v136 = vpop.f32.mrf.mxu0
    %v137 = vadd.f32 0.0, %v136
    %138 = vdwg.mxu0
    %v139 = vmul.f32 %v128, %v89
    %v140 = vmul.f32 %v131, %v90
    %v141 = vmul.f32 %v134, %v91
    %v142 = vmul.f32 %v137, %v92
    %v143 = vsel %vm94, %v139, 0.0
    %144 = vadd.xlane.f32.xlu0 %v143
    %v145 = vpop.xlane.xlu0 %144
    %v146 = vsel %vm94, %v140, 0.0
    %147 = vadd.xlane.f32.xlu0 %v146
    %v148 = vpop.xlane.xlu0 %147
    %v149 = vsel %vm94, %v141, 0.0
    %150 = vadd.xlane.f32.xlu0 %v149
    %v151 = vpop.xlane.xlu0 %150
    %v152 = vsel %vm94, %v142, 0.0
    %153 = vadd.xlane.f32.xlu0 %v152
    %v154 = vpop.xlane.xlu0 %153
    %v155 = vmul.f32 %v128, 0.03125
    %v156 = vmul.f32 %v131, 0.03125
    %v157 = vmul.f32 %v134, 0.03125
    %v158 = vmul.f32 %v137, 0.03125
    %v159 = vmul.f32 %v145, 0.03125
    %v160 = vmul.f32 %v148, 0.03125
    %v161 = vmul.f32 %v151, 0.03125
    %v162 = vmul.f32 %v154, 0.03125
    %v163 = vmul.f32 %v155, %v155
    %v164 = vmul.f32 %v156, %v156
    %v165 = vmul.f32 %v157, %v157
    %v166 = vmul.f32 %v158, %v158
    %v167 = vsub.f32 %v159, %v163
    %v168 = vsub.f32 %v160, %v164
    %v169 = vsub.f32 %v161, %v165
    %v170 = vsub.f32 %v162, %v166
    %v171 = vmax.f32 %v167, 0.0
    %v172 = vmax.f32 %v168, 0.0
    %v173 = vmax.f32 %v169, 0.0
    %v174 = vmax.f32 %v170, 0.0
    %v175 = vld [vmem:[%s2] sm:$0xff]
    %v176 = vld [vmem:[%s2 + $0x8] sm:$0xff]
    %v177 = vld [vmem:[%s2 + $0x10] sm:$0xff]
    %v178 = vld [vmem:[%s2 + $0x18] sm:$0xff]
    %v179 = vadd.f32 %v171, 1e-05
    %v180 = vadd.f32 %v172, 1e-05
    %v181 = vadd.f32 %v173, 1e-05
    %v182 = vadd.f32 %v174, 1e-05
    %v183 = vrsqrt.pop %v179
    %v184 = vmul.f32 %v183, %v179
    %v185 = vmul.f32 %v184, %v183
    %v186 = vmul.f32 0.5, %v185
    %v187 = vsub.f32 1.5, %v186
    %v188 = vmul.f32 %v183, %v187
    %vm189 = vweird.f32 %v179
    %vm190 = vweird.f32 %v183
    %vm191 = vmor %vm189, %vm190
    %v192 = vsel %vm191, %v183, %v188
    %v193 = vrsqrt.pop %v180
    %v194 = vmul.f32 %v193, %v180
    %v195 = vmul.f32 %v194, %v193
    %v196 = vmul.f32 0.5, %v195
    %v197 = vsub.f32 1.5, %v196
    %v198 = vmul.f32 %v193, %v197
    %vm199 = vweird.f32 %v180
    %vm200 = vweird.f32 %v193
    %vm201 = vmor %vm199, %vm200
    %v202 = vsel %vm201, %v193, %v198
    %v203 = vrsqrt.pop %v181
    %v204 = vmul.f32 %v203, %v181
    %v205 = vmul.f32 %v204, %v203
    %v206 = vmul.f32 0.5, %v205
    %v207 = vsub.f32 1.5, %v206
    %v208 = vmul.f32 %v203, %v207
    %vm209 = vweird.f32 %v181
    %vm210 = vweird.f32 %v203
    %vm211 = vmor %vm209, %vm210
    %v212 = vsel %vm211, %v203, %v208
    %v213 = vrsqrt.pop %v182
    %v214 = vmul.f32 %v213, %v182
    %v215 = vmul.f32 %v214, %v213
    %v216 = vmul.f32 0.5, %v215
    %v217 = vsub.f32 1.5, %v216
    %v218 = vmul.f32 %v213, %v217
    %vm219 = vweird.f32 %v182
    %vm220 = vweird.f32 %v213
    %vm221 = vmor %vm219, %vm220
    %v222 = vsel %vm221, %v213, %v218
    %227 = vrot.lane.b32.xlu0 %v192, 124
    %v228 = vpop.permute.xlu0 %227
    %229 = vrot.lane.b32.xlu0 %v202, 124
    %v230 = vpop.permute.xlu0 %229
    %231 = vrot.lane.b32.xlu0 %v212, 124
    %v232 = vpop.permute.xlu0 %231
    %233 = vrot.lane.b32.xlu0 %v222, 124
    %v234 = vpop.permute.xlu0 %233
    %v239 = vmul.f32 %v175, %v228
    %v240 = vmul.f32 %v176, %v230
    %v241 = vmul.f32 %v177, %v232
    %v242 = vmul.f32 %v178, %v234
    %vm243 = vcmask 7168
    %244 = vst.msk [vmem:[%s4] sm:$0xff] %vm243, %v239
    %245 = vst.msk [vmem:[%s4 + $0x8] sm:$0xff] %vm243, %v240
    %246 = vst.msk [vmem:[%s4 + $0x10] sm:$0xff] %vm243, %v241
    %247 = vst.msk [vmem:[%s4 + $0x18] sm:$0xff] %vm243, %v242
    %v248 = vld [vmem:[%s3] sm:$0xff]
    %v249 = vld [vmem:[%s3 + $0x8] sm:$0xff]
    %v250 = vld [vmem:[%s3 + $0x10] sm:$0xff]
    %v251 = vld [vmem:[%s3 + $0x18] sm:$0xff]
    %256 = vrot.lane.b32.xlu0 %v239, 4
    %v257 = vpop.permute.xlu0 %256
    %258 = vrot.lane.b32.xlu0 %v240, 4
    %v259 = vpop.permute.xlu0 %258
    %260 = vrot.lane.b32.xlu0 %v241, 4
    %v261 = vpop.permute.xlu0 %260
    %262 = vrot.lane.b32.xlu0 %v242, 4
    %v263 = vpop.permute.xlu0 %262
    %v268 = vmul.f32 %v155, %v257
    %v269 = vmul.f32 %v156, %v259
    %v270 = vmul.f32 %v157, %v261
    %v271 = vmul.f32 %v158, %v263
    %276 = vrot.lane.b32.xlu0 %v268, 124
    %v277 = vpop.permute.xlu0 %276
    %278 = vrot.lane.b32.xlu0 %v269, 124
    %v279 = vpop.permute.xlu0 %278
    %280 = vrot.lane.b32.xlu0 %v270, 124
    %v281 = vpop.permute.xlu0 %280
    %282 = vrot.lane.b32.xlu0 %v271, 124
    %v283 = vpop.permute.xlu0 %282
    %v288 = vsub.f32 %v248, %v277
    %v289 = vsub.f32 %v249, %v279
    %v290 = vsub.f32 %v250, %v281
    %v291 = vsub.f32 %v251, %v283
    %292 = vst.msk [vmem:[%s5] sm:$0xff] %vm243, %v288
    %293 = vst.msk [vmem:[%s5 + $0x8] sm:$0xff] %vm243, %v289
    %294 = vst.msk [vmem:[%s5 + $0x10] sm:$0xff] %vm243, %v290
    %295 = vst.msk [vmem:[%s5 + $0x18] sm:$0xff] %vm243, %v291
  $region25: #{tpu_custom_call.1} parent=0 // pred_fallthru
    _
  // Predicated region
  $region26: #{tpu_custom_call.1} parent=0 // pred_check
    _
  $region27: #{tpu_custom_call.1} parent=0 // pred_check_branch
    %297 = sbr.rel (0) target = $region29
  $region28: #{tpu_custom_call.1} parent=0 // pred_region
    _
  $region29: #{tpu_custom_call.1} parent=0 // pred_fallthru
    _
  // Predicated region
  $region30: #{tpu_custom_call.1} parent=0 // pred_check
    _
  $region31: #{tpu_custom_call.1} parent=0 // pred_check_branch
    %299 = sbr.rel (0) target = $region33
  $region32: #{tpu_custom_call.1} parent=0 // pred_region
    _
  $region33: #{tpu_custom_call.1} parent=0 // pred_fallthru
    _
  // Predicated region
  $region34: #{tpu_custom_call.1} parent=0 // pred_check
    _
  $region35: #{tpu_custom_call.1} parent=0 // pred_check_branch
    %301 = sbr.rel (0) target = $region37
  $region36: #{tpu_custom_call.1} parent=0 // pred_region
    _
  $region37: #{tpu_custom_call.1} parent=0 // pred_fallthru
    _
  // Predicated region
  $region38: #{tpu_custom_call.1} parent=0 // pred_check
    _
  $region39: #{tpu_custom_call.1} parent=0 // pred_check_branch
    %303 = sbr.rel (0) target = $region41
  $region40: #{tpu_custom_call.1} parent=0 // pred_region
    _
  $region41: #{tpu_custom_call.1} parent=0 // pred_fallthru
    _

</llo_original>
